<compile_context>
chip_gen: v7x
topology: tpu7x:2x2x1
jax: 0.10.0
libtpu: 0.0.40
codegen_flags: <defaults>
</compile_context>

<pallas_src>
import math

import jax
import jax.numpy as jnp
from jax.experimental import pallas as pl
from jax.experimental.pallas import tpu as pltpu


def _round_up(n, m):
    return ((n + m - 1) // m) * m


def _pad2(a, rows, cols):
    return jnp.pad(a, ((0, rows - a.shape[0]), (0, cols - a.shape[1])))


def _disc_kernel(x_ref, w1_ref, b1_ref, w2_ref, b2_ref, w3_ref, b3_ref, o_ref):
    # Layer 1: Linear(D -> D) + ReLU   (bf16 operands on MXU, f32 accumulate)
    h1 = jnp.dot(x_ref[...], w1_ref[...], preferred_element_type=jnp.float32)
    h1 = jnp.maximum(h1 + b1_ref[...], 0.0)
    # Layer 2: Linear(D -> D//2) + ReLU
    h2 = jnp.dot(h1.astype(jnp.bfloat16), w2_ref[...],
                 preferred_element_type=jnp.float32)
    h2 = jnp.maximum(h2 + b2_ref[...], 0.0)
    # Layer 3: Linear(D//2 -> 1)
    out = jnp.dot(h2.astype(jnp.bfloat16), w3_ref[...],
                  preferred_element_type=jnp.float32)
    o_ref[...] = (out + b3_ref[...]).astype(o_ref.dtype)


def discriminator_faces_forward(x, params, *, batch_tile=512):
    """x: [B, num_dim] float32. Returns [B, 1] float32."""
    w1, b1, w2, b2, w3, b3 = params
    B, D = x.shape
    H1 = w1.shape[1]          # num_dim
    H2 = w2.shape[1]          # num_dim // 2

    # Pad contraction / hidden dims to multiples of 128 (zero padding is exact).
    Dp = _round_up(max(D, 128), 128)
    H1p = _round_up(max(H1, 128), 128)
    H2p = _round_up(max(H2, 128), 128)

    # Batch tiling (TB multiple of 8; small batches use a single small tile).
    TB = min(batch_tile, _round_up(B, 8))
    Bp = _round_up(B, TB)

    x_p = _pad2(x, Bp, Dp).astype(jnp.bfloat16)
    w1_p = _pad2(w1, Dp, H1p).astype(jnp.bfloat16)
    b1_p = _pad2(b1, 1, H1p).astype(jnp.float32)
    w2_p = _pad2(w2, H1p, H2p).astype(jnp.bfloat16)
    b2_p = _pad2(b2, 1, H2p).astype(jnp.float32)
    w3_p = _pad2(w3, H2p, 1).astype(jnp.bfloat16)
    b3_p = b3.astype(jnp.float32)                     # (1, 1)

    out = pl.pallas_call(
        _disc_kernel,
        out_shape=jax.ShapeDtypeStruct((Bp, 1), jnp.float32),
        grid=(Bp // TB,),
        in_specs=[
            pl.BlockSpec((TB, Dp), lambda i: (i, 0)),     # x: batch-tiled
            pl.BlockSpec((Dp, H1p), lambda i: (0, 0)),    # w1: resident
            pl.BlockSpec((1, H1p), lambda i: (0, 0)),     # b1: resident
            pl.BlockSpec((H1p, H2p), lambda i: (0, 0)),   # w2: resident
            pl.BlockSpec((1, H2p), lambda i: (0, 0)),     # b2: resident
            pl.BlockSpec((H2p, 1), lambda i: (0, 0)),     # w3: resident
            pl.BlockSpec((1, 1), lambda i: (0, 0)),       # b3: resident
        ],
        out_specs=pl.BlockSpec((TB, 1), lambda i: (i, 0)),
        compiler_params=pltpu.CompilerParams(
            dimension_semantics=("parallel",)),
    )(x_p, w1_p, b1_p, w2_p, b2_p, w3_p, b3_p)
    return out[:B]


def _xavier_uniform(key, fan_in, fan_out):
    # Matches torch.nn.init.xavier_uniform_ on a [fan_out, fan_in] weight;
    # we directly build the transposed [fan_in, fan_out] matrix.
    bound = math.sqrt(6.0 / (fan_in + fan_out))
    return jax.random.uniform(
        key, (fan_in, fan_out), dtype=jnp.float32, minval=-bound, maxval=bound
    )


def init_discriminator_faces_params(key, num_dim):
    h2 = num_dim // 2
    k1, k2, k3 = jax.random.split(key, 3)
    w1 = _xavier_uniform(k1, num_dim, num_dim)
    b1 = jnp.zeros((1, num_dim), jnp.float32)
    w2 = _xavier_uniform(k2, num_dim, h2)
    b2 = jnp.zeros((1, h2), jnp.float32)
    w3 = _xavier_uniform(k3, h2, 1)
    b3 = jnp.zeros((1, 1), jnp.float32)
    return (w1, b1, w2, b2, w3, b3)


def _reference_forward(x, params):
    # Mirrors the kernel's numerics: bf16 matmul operands, f32 accumulation.
    w1, b1, w2, b2, w3, b3 = params
    bf = jnp.bfloat16
    h1 = jnp.maximum(
        jnp.dot(x.astype(bf), w1.astype(bf),
                preferred_element_type=jnp.float32) + b1, 0.0)
    h2 = jnp.maximum(
        jnp.dot(h1.astype(bf), w2.astype(bf),
                preferred_element_type=jnp.float32) + b2, 0.0)
    return jnp.dot(h2.astype(bf), w3.astype(bf),
                   preferred_element_type=jnp.float32) + b3


if __name__ == "__main__":
    key = jax.random.PRNGKey(0)
    num_dim, batch = 32, 8

    pkey, xkey = jax.random.split(key)
    params = init_discriminator_faces_params(pkey, num_dim)
    x = jax.random.normal(xkey, (batch, num_dim), dtype=jnp.float32)

    out = discriminator_faces_forward(x, params)
    out = jax.block_until_ready(out)

    ref = _reference_forward(x, params)
    assert out.shape == (batch, 1)
    assert jnp.allclose(out, ref, atol=5e-3, rtol=5e-3)

    print("KERNEL_OK")
</pallas_src>

<mosaic_0001>
module attributes {stable_mosaic.version = 11 : i64} {
  func.func @_disc_kernel(%arg0: i32, %arg1: memref<8x128xbf16, #tpu.memory_space<vmem>>, %arg2: memref<128x128xbf16, #tpu.memory_space<vmem>>, %arg3: memref<1x128xf32, #tpu.memory_space<vmem>>, %arg4: memref<128x128xbf16, #tpu.memory_space<vmem>>, %arg5: memref<1x128xf32, #tpu.memory_space<vmem>>, %arg6: memref<128x1xbf16, #tpu.memory_space<vmem>>, %arg7: memref<1x1xf32, #tpu.memory_space<vmem>>, %arg8: memref<8x1xf32, #tpu.memory_space<vmem>>) attributes {dimension_semantics = [#tpu.dimension_semantics<parallel>], iteration_bounds = array<i64: 1>, scalar_prefetch = 0 : i64, scratch_operands = 0 : i64, tpu.core_type = #tpu.core_type<tc>, window_params = [{transform_indices = @transform_0, window_bounds = array<i64: 8, 128>}, {pipeline_mode = #tpu.pipeline_mode<synchronous>, transform_indices = @transform_1, window_bounds = array<i64: 128, 128>}, {pipeline_mode = #tpu.pipeline_mode<synchronous>, transform_indices = @transform_2, window_bounds = array<i64: 1, 128>}, {pipeline_mode = #tpu.pipeline_mode<synchronous>, transform_indices = @transform_3, window_bounds = array<i64: 128, 128>}, {pipeline_mode = #tpu.pipeline_mode<synchronous>, transform_indices = @transform_4, window_bounds = array<i64: 1, 128>}, {pipeline_mode = #tpu.pipeline_mode<synchronous>, transform_indices = @transform_5, window_bounds = array<i64: 128, 1>}, {pipeline_mode = #tpu.pipeline_mode<synchronous>, transform_indices = @transform_6, window_bounds = array<i64: 1, 1>}, {transform_indices = @transform_7, window_bounds = array<i64: 8, 1>}]} {
    %c0 = arith.constant 0 : index
    %c0_0 = arith.constant 0 : index
    %0 = vector.load %arg1[%c0, %c0_0] : memref<8x128xbf16, #tpu.memory_space<vmem>>, vector<8x128xbf16>
    %c0_1 = arith.constant 0 : index
    %c0_2 = arith.constant 0 : index
    %1 = vector.load %arg2[%c0_1, %c0_2] : memref<128x128xbf16, #tpu.memory_space<vmem>>, vector<128x128xbf16>
    %cst = arith.constant dense<0.000000e+00> : vector<8x128xf32>
    %2 = tpu.matmul %0, %1, %cst {dimension_numbers = #tpu.dot_dimension_numbers<[1], [0], [0], [1], [0, 0, 1, 1], [], []>} : vector<8x128xbf16>, vector<128x128xbf16>, vector<8x128xf32> -> vector<8x128xf32>
    %c0_3 = arith.constant 0 : index
    %c0_4 = arith.constant 0 : index
    %3 = vector.load %arg3[%c0_3, %c0_4] : memref<1x128xf32, #tpu.memory_space<vmem>>, vector<1x128xf32>
    %4 = vector.broadcast %3 : vector<1x128xf32> to vector<8x128xf32>
    %5 = arith.addf %2, %4 : vector<8x128xf32>
    %cst_5 = arith.constant 0.000000e+00 : f32
    %6 = vector.broadcast %cst_5 : f32 to vector<8x128xf32>
    %7 = arith.maximumf %5, %6 : vector<8x128xf32>
    %8 = arith.truncf %7 : vector<8x128xf32> to vector<8x128xbf16>
    %c0_6 = arith.constant 0 : index
    %c0_7 = arith.constant 0 : index
    %9 = vector.load %arg4[%c0_6, %c0_7] : memref<128x128xbf16, #tpu.memory_space<vmem>>, vector<128x128xbf16>
    %cst_8 = arith.constant dense<0.000000e+00> : vector<8x128xf32>
    %10 = tpu.matmul %8, %9, %cst_8 {dimension_numbers = #tpu.dot_dimension_numbers<[1], [0], [0], [1], [0, 0, 1, 1], [], []>} : vector<8x128xbf16>, vector<128x128xbf16>, vector<8x128xf32> -> vector<8x128xf32>
    %c0_9 = arith.constant 0 : index
    %c0_10 = arith.constant 0 : index
    %11 = vector.load %arg5[%c0_9, %c0_10] : memref<1x128xf32, #tpu.memory_space<vmem>>, vector<1x128xf32>
    %12 = vector.broadcast %11 : vector<1x128xf32> to vector<8x128xf32>
    %13 = arith.addf %10, %12 : vector<8x128xf32>
    %cst_11 = arith.constant 0.000000e+00 : f32
    %14 = vector.broadcast %cst_11 : f32 to vector<8x128xf32>
    %15 = arith.maximumf %13, %14 : vector<8x128xf32>
    %16 = arith.truncf %15 : vector<8x128xf32> to vector<8x128xbf16>
    %c0_12 = arith.constant 0 : index
    %c0_13 = arith.constant 0 : index
    %17 = vector.load %arg6[%c0_12, %c0_13] : memref<128x1xbf16, #tpu.memory_space<vmem>>, vector<128x1xbf16>
    %cst_14 = arith.constant dense<0.000000e+00> : vector<8x1xf32>
    %18 = tpu.matmul %16, %17, %cst_14 {dimension_numbers = #tpu.dot_dimension_numbers<[1], [0], [0], [1], [0, 0, 1, 1], [], []>} : vector<8x128xbf16>, vector<128x1xbf16>, vector<8x1xf32> -> vector<8x1xf32>
    %c0_15 = arith.constant 0 : index
    %c0_16 = arith.constant 0 : index
    %19 = vector.load %arg7[%c0_15, %c0_16] : memref<1x1xf32, #tpu.memory_space<vmem>>, vector<1x1xf32>
    %20 = vector.broadcast %19 : vector<1x1xf32> to vector<8x1xf32>
    %21 = arith.addf %18, %20 : vector<8x1xf32>
    %c0_17 = arith.constant 0 : index
    %c0_18 = arith.constant 0 : index
    %22 = vector.load %arg8[%c0_17, %c0_18] : memref<8x1xf32, #tpu.memory_space<vmem>>, vector<8x1xf32>
    tpu.vector_store %arg8[%c0_17, %c0_18], %21 {strides = array<i32>} : memref<8x1xf32, #tpu.memory_space<vmem>>, vector<8x1xf32>,
    return
  }
  func.func @transform_0(%arg0: i32) -> (i32, i32) {
    %c0_i32 = arith.constant 0 : i32
    %c0_i32_0 = arith.constant 0 : i32
    return %arg0, %c0_i32 : i32, i32
  }
  func.func @transform_1(%arg0: i32) -> (i32, i32) {
    %c0_i32 = arith.constant 0 : i32
    %c0_i32_0 = arith.constant 0 : i32
    %c0_i32_1 = arith.constant 0 : i32
    return %c0_i32, %c0_i32_0 : i32, i32
  }
  func.func @transform_2(%arg0: i32) -> (i32, i32) {
    %c0_i32 = arith.constant 0 : i32
    %c0_i32_0 = arith.constant 0 : i32
    %c0_i32_1 = arith.constant 0 : i32
    return %c0_i32, %c0_i32_0 : i32, i32
  }
  func.func @transform_3(%arg0: i32) -> (i32, i32) {
    %c0_i32 = arith.constant 0 : i32
    %c0_i32_0 = arith.constant 0 : i32
    %c0_i32_1 = arith.constant 0 : i32
    return %c0_i32, %c0_i32_0 : i32, i32
  }
  func.func @transform_4(%arg0: i32) -> (i32, i32) {
    %c0_i32 = arith.constant 0 : i32
    %c0_i32_0 = arith.constant 0 : i32
    %c0_i32_1 = arith.constant 0 : i32
    return %c0_i32, %c0_i32_0 : i32, i32
  }
  func.func @transform_5(%arg0: i32) -> (i32, i32) {
    %c0_i32 = arith.constant 0 : i32
    %c0_i32_0 = arith.constant 0 : i32
    %c0_i32_1 = arith.constant 0 : i32
    return %c0_i32, %c0_i32_0 : i32, i32
  }
  func.func @transform_6(%arg0: i32) -> (i32, i32) {
    %c0_i32 = arith.constant 0 : i32
    %c0_i32_0 = arith.constant 0 : i32
    %c0_i32_1 = arith.constant 0 : i32
    return %c0_i32, %c0_i32_0 : i32, i32
  }
  func.func @transform_7(%arg0: i32) -> (i32, i32) {
    %c0_i32 = arith.constant 0 : i32
    %c0_i32_0 = arith.constant 0 : i32
    return %arg0, %c0_i32 : i32, i32
  }
}

</mosaic_0001>

<llo_original>
// kernel: tpu_custom_call.1
$region0: #{tpu_custom_call.1}
  #allocation0 [shape = 'u32[]', space=smem, size = 0x4, offset = 0x4, fixed_abs, tag = 'smem constant byte address 0x4 - core index']
  #allocation1 [shape = 'u32[144,128]{1,0:T(1,128)}', space=vmem, size = 0x12000, scoped, tag = 'internal scratch']
  #allocation2 [shape = 'f32[1,1]{1,0:T(1,128)S(1)}', space=vmem, size = 0x200, scoped, tag = 'scoped memory for tpu_custom_call.1']
  %s0 = inlined_call_operand.vmem [shape: bf16[8,128], index: 0, kind: input, shape index: {}]
  %s1 = inlined_call_operand.vmem [shape: bf16[128,128], index: 1, kind: input, shape index: {}]
  %s2 = inlined_call_operand.vmem [shape: f32[1,128], index: 2, kind: input, shape index: {}]
  %s3 = inlined_call_operand.hbm [shape: bf16[128,128], index: 3, kind: input, shape index: {}]
  %s4 = inlined_call_operand.vmem [shape: f32[1,128], index: 4, kind: input, shape index: {}]
  %s5 = inlined_call_operand.vmem [shape: bf16[128,1], index: 5, kind: input, shape index: {}]
  %s6 = inlined_call_operand.<no memory space> [shape: f32[1,1], index: 6, kind: input, shape index: {}]
  %s7 = inlined_call_operand.vmem [shape: f32[8,1], index: 7, kind: output, shape index: {}]
  %s8 = sld [smem:[#allocation0]]
  $region42: #{tpu_custom_call.1} parent=0
    _
  %s10 = ssub.s32 1, %s8
  %s11 = scalar_select 0, %s10, %s8
  %v12 = vstv %s6
  %13 = vst [vmem:[#allocation2] sm:$0x1] %v12
  $region1: #{tpu_custom_call.1} parent=0
    #allocation3 [shape = 'u8[32768]{0}', space=vmem, size = 0x8000, scoped, tag = 'input window, operand 3, single buffered']
    #allocation4 [shape = 's32[1]{0}', space=sflag, size = 0x4, scoped, tag = 'scoped memory for tpu_custom_call.1']
    %14 = vsyncpa [#allocation4], 0
    // Predicated region
    $region2: #{tpu_custom_call.1} parent=1 // pred_check
      _
    $region3: #{tpu_custom_call.1} parent=1 // pred_check_branch
      %16 = sbr.rel (0) target = $region5
    $region4: #{tpu_custom_call.1} parent=1 // pred_region
      _
    $region5: #{tpu_custom_call.1} parent=1 // pred_fallthru
      _
    // Predicated region
    $region6: #{tpu_custom_call.1} parent=1 // pred_check
      _
    $region7: #{tpu_custom_call.1} parent=1 // pred_check_branch
      %18 = sbr.rel (0) target = $region9
    $region8: #{tpu_custom_call.1} parent=1 // pred_region
      _
    $region9: #{tpu_custom_call.1} parent=1 // pred_fallthru
      _
    // Predicated region
    $region10: #{tpu_custom_call.1} parent=1 // pred_check
      _
    $region11: #{tpu_custom_call.1} parent=1 // pred_check_branch
      %20 = sbr.rel (0) target = $region13
    $region12: #{tpu_custom_call.1} parent=1 // pred_region
      _
    $region13: #{tpu_custom_call.1} parent=1 // pred_fallthru
      _
    // Predicated region
    $region14: #{tpu_custom_call.1} parent=1 // pred_check
      _
    $region15: #{tpu_custom_call.1} parent=1 // pred_check_branch
      %22 = sbr.rel (0) target = $region17
    $region16: #{tpu_custom_call.1} parent=1 // pred_region
      %s24 = ssub.s32 1024, 1024
      %25 = vsyncadd [#allocation4], %s24
      %s26 = sshll.u32 [#allocation3], 4
      %s27 = int_to_ptr.vmem [resolvable:$true] %s26
      %32 = dma.hbm_to_vmem [thread:$0]  %s3, 1024, %s27, [#allocation4], 64, 64, 4
    $region17: #{tpu_custom_call.1} parent=1 // pred_fallthru
      _
    // Predicated region
    $region18: #{tpu_custom_call.1} parent=1 // pred_check
      _
    $region19: #{tpu_custom_call.1} parent=1 // pred_check_branch
      %34 = sbr.rel (0) target = $region21
    $region20: #{tpu_custom_call.1} parent=1 // pred_region
      _
    $region21: #{tpu_custom_call.1} parent=1 // pred_fallthru
      _
    // Predicated region
    $region22: #{tpu_custom_call.1} parent=1 // pred_check
      _
    $region23: #{tpu_custom_call.1} parent=1 // pred_check_branch
      %36 = sbr.rel (0) target = $region25
    $region24: #{tpu_custom_call.1} parent=1 // pred_region
      _
    $region25: #{tpu_custom_call.1} parent=1 // pred_fallthru
      _
    // Predicated region
    $region26: #{tpu_custom_call.1} parent=1 // pred_check
      _
    $region27: #{tpu_custom_call.1} parent=1 // pred_check_branch
      %38 = sbr.rel (0) target = $region29
    $region28: #{tpu_custom_call.1} parent=1 // pred_region
      _
    $region29: #{tpu_custom_call.1} parent=1 // pred_fallthru
      _
    // Predicated region
    $region30: #{tpu_custom_call.1} parent=1 // pred_check
      _
    $region31: #{tpu_custom_call.1} parent=1 // pred_check_branch
      %40 = sbr.rel (0) target = $region33
    $region32: #{tpu_custom_call.1} parent=1 // pred_region
      %41 = dma.done [#allocation4], 1024
    $region33: #{tpu_custom_call.1} parent=1 // pred_fallthru
      _
    %v43 = vld [vmem:[%s0] sm:$0xf]
    %v44 = vld [vmem:[%s1] sm:$0xf]
    %v45 = vld [vmem:[%s1 + $0x4] sm:$0xf]
    %v46 = vld [vmem:[%s1 + $0x8] sm:$0xf]
    %v47 = vld [vmem:[%s1 + $0xc] sm:$0xf]
    %v48 = vld [vmem:[%s1 + $0x10] sm:$0xf]
    %v49 = vld [vmem:[%s1 + $0x14] sm:$0xf]
    %v50 = vld [vmem:[%s1 + $0x18] sm:$0xf]
    %v51 = vld [vmem:[%s1 + $0x1c] sm:$0xf]
    %v52 = vld [vmem:[%s1 + $0x20] sm:$0xf]
    %v53 = vld [vmem:[%s1 + $0x24] sm:$0xf]
    %v54 = vld [vmem:[%s1 + $0x28] sm:$0xf]
    %v55 = vld [vmem:[%s1 + $0x2c] sm:$0xf]
    %v56 = vld [vmem:[%s1 + $0x30] sm:$0xf]
    %v57 = vld [vmem:[%s1 + $0x34] sm:$0xf]
    %v58 = vld [vmem:[%s1 + $0x38] sm:$0xf]
    %v59 = vld [vmem:[%s1 + $0x3c] sm:$0xf]
    %v60 = vld [vmem:[%s2] sm:$0x1]
    %v62 = vlaneseq
    %v63 = vshrl.u32 %v62, 7
    %v64 = vsub.s32 0, %v63
    %v65 = vrot.slane %v60, %v64
    %v83 = vunpack.c.l.b16 %v44
    %v84 = vunpack.c.l.b16 %v45
    %v85 = vunpack.c.l.b16 %v46
    %v86 = vunpack.c.l.b16 %v47
    %v87 = vunpack.c.l.b16 %v48
    %v88 = vunpack.c.l.b16 %v49
    %v89 = vunpack.c.l.b16 %v50
    %v90 = vunpack.c.l.b16 %v51
    %v91 = vunpack.c.l.b16 %v52
    %v92 = vunpack.c.l.b16 %v53
    %v93 = vunpack.c.l.b16 %v54
    %v94 = vunpack.c.l.b16 %v55
    %v95 = vunpack.c.l.b16 %v56
    %v96 = vunpack.c.l.b16 %v57
    %v97 = vunpack.c.l.b16 %v58
    %v98 = vunpack.c.l.b16 %v59
    %v99 = vpack.c.b16 %v84, %v83
    %v100 = vpack.c.b16 %v86, %v85
    %v101 = vpack.c.b16 %v88, %v87
    %v102 = vpack.c.b16 %v90, %v89
    %v103 = vpack.c.b16 %v92, %v91
    %v104 = vpack.c.b16 %v94, %v93
    %v105 = vpack.c.b16 %v96, %v95
    %v106 = vpack.c.b16 %v98, %v97
    %115 = vmatprep.subr.bf16.mxu0 0
    %116 = vmatpush1.bf16.msra.mxu0 %v99
    %117 = vmatprep.subr.bf16.mxu0 0
    %118 = vmatpush1.bf16.msra.mxu0 %v100
    %119 = vmatprep.subr.bf16.mxu0 0
    %120 = vmatpush1.bf16.msra.mxu0 %v101
    %121 = vmatprep.subr.bf16.mxu0 0
    %122 = vmatpush1.bf16.msra.mxu0 %v102
    %123 = vmatprep.subr.bf16.mxu0 0
    %124 = vmatpush1.bf16.msra.mxu0 %v103
    %125 = vmatprep.subr.bf16.mxu0 0
    %126 = vmatpush1.bf16.msra.mxu0 %v104
    %127 = vmatprep.subr.bf16.mxu0 0
    %128 = vmatpush1.bf16.msra.mxu0 %v105
    %129 = vmatprep.subr.bf16.mxu0 0
    %130 = vmatpush1.bf16.msra.mxu0 %v106
    %131 = vmatprep.subr.bf16.mxu0 0
    %132 = vmatpush1.bf16.msra.mxu0 0
    %133 = vmatprep.subr.bf16.mxu0 0
    %134 = vmatpush1.bf16.msra.mxu0 0
    %135 = vmatprep.subr.bf16.mxu0 0
    %136 = vmatpush1.bf16.msra.mxu0 0
    %137 = vmatprep.subr.bf16.mxu0 0
    %138 = vmatpush1.bf16.msra.mxu0 0
    %139 = vmatprep.subr.bf16.mxu0 0
    %140 = vmatpush1.bf16.msra.mxu0 0
    %141 = vmatprep.subr.bf16.mxu0 0
    %142 = vmatpush1.bf16.msra.mxu0 0
    %143 = vmatprep.subr.bf16.mxu0 0
    %144 = vmatpush1.bf16.msra.mxu0 0
    %145 = vmatprep.subr.bf16.mxu0 0
    %146 = vmatpush1.bf16.msra.mxu0 0
    %147 = vmatprep.mubr.bf16.mxu0 0
    %148 = vmatmul.mubr.bf16.gmra.mrb[0].mxu0 %v43
    %v149 = vpop.f32.mrb[0].mxu0
    %v150 = vadd.f32 %v65, %v149
    %v151 = vpop.f32.mrb[0].mxu0
    %v152 = vpop.f32.mrb[0].mxu0
    %v153 = vpop.f32.mrb[0].mxu0
    %154 = vdwg.mxu0
    %v155 = vmax.f32 %v150, 0.0
    %v156 = vpack.c.bf16 %v155, %v155
    %v157 = vld [vmem:[#allocation3] sm:$0xf]
    %v158 = vld [vmem:[#allocation3 + $0x4] sm:$0xf]
    %v159 = vld [vmem:[#allocation3 + $0x8] sm:$0xf]
    %v160 = vld [vmem:[#allocation3 + $0xc] sm:$0xf]
    %v161 = vld [vmem:[#allocation3 + $0x10] sm:$0xf]
    %v162 = vld [vmem:[#allocation3 + $0x14] sm:$0xf]
    %v163 = vld [vmem:[#allocation3 + $0x18] sm:$0xf]
    %v164 = vld [vmem:[#allocation3 + $0x1c] sm:$0xf]
    %v165 = vld [vmem:[#allocation3 + $0x20] sm:$0xf]
    %v166 = vld [vmem:[#allocation3 + $0x24] sm:$0xf]
    %v167 = vld [vmem:[#allocation3 + $0x28] sm:$0xf]
    %v168 = vld [vmem:[#allocation3 + $0x2c] sm:$0xf]
    %v169 = vld [vmem:[#allocation3 + $0x30] sm:$0xf]
    %v170 = vld [vmem:[#allocation3 + $0x34] sm:$0xf]
    %v171 = vld [vmem:[#allocation3 + $0x38] sm:$0xf]
    %v172 = vld [vmem:[#allocation3 + $0x3c] sm:$0xf]
    %v173 = vld [vmem:[%s4] sm:$0x1]
    %v175 = vlaneseq
    %v176 = vshrl.u32 %v175, 7
    %v177 = vsub.s32 0, %v176
    %v178 = vrot.slane %v173, %v177
    %v196 = vunpack.c.l.b16 %v157
    %v197 = vunpack.c.l.b16 %v158
    %v198 = vunpack.c.l.b16 %v159
    %v199 = vunpack.c.l.b16 %v160
    %v200 = vunpack.c.l.b16 %v161
    %v201 = vunpack.c.l.b16 %v162
    %v202 = vunpack.c.l.b16 %v163
    %v203 = vunpack.c.l.b16 %v164
    %v204 = vunpack.c.l.b16 %v165
    %v205 = vunpack.c.l.b16 %v166
    %v206 = vunpack.c.l.b16 %v167
    %v207 = vunpack.c.l.b16 %v168
    %v208 = vunpack.c.l.b16 %v169
    %v209 = vunpack.c.l.b16 %v170
    %v210 = vunpack.c.l.b16 %v171
    %v211 = vunpack.c.l.b16 %v172
    %v212 = vpack.c.b16 %v197, %v196
    %v213 = vpack.c.b16 %v199, %v198
    %v214 = vpack.c.b16 %v201, %v200
    %v215 = vpack.c.b16 %v203, %v202
    %v216 = vpack.c.b16 %v205, %v204
    %v217 = vpack.c.b16 %v207, %v206
    %v218 = vpack.c.b16 %v209, %v208
    %v219 = vpack.c.b16 %v211, %v210
    %228 = vmatprep.subr.bf16.mxu0 0
    %229 = vmatpush1.bf16.msra.mxu0 %v212
    %230 = vmatprep.subr.bf16.mxu0 0
    %231 = vmatpush1.bf16.msra.mxu0 %v213
    %232 = vmatprep.subr.bf16.mxu0 0
    %233 = vmatpush1.bf16.msra.mxu0 %v214
    %234 = vmatprep.subr.bf16.mxu0 0
    %235 = vmatpush1.bf16.msra.mxu0 %v215
    %236 = vmatprep.subr.bf16.mxu0 0
    %237 = vmatpush1.bf16.msra.mxu0 %v216
    %238 = vmatprep.subr.bf16.mxu0 0
    %239 = vmatpush1.bf16.msra.mxu0 %v217
    %240 = vmatprep.subr.bf16.mxu0 0
    %241 = vmatpush1.bf16.msra.mxu0 %v218
    %242 = vmatprep.subr.bf16.mxu0 0
    %243 = vmatpush1.bf16.msra.mxu0 %v219
    %244 = vmatprep.subr.bf16.mxu0 0
    %245 = vmatpush1.bf16.msra.mxu0 0
    %246 = vmatprep.subr.bf16.mxu0 0
    %247 = vmatpush1.bf16.msra.mxu0 0
    %248 = vmatprep.subr.bf16.mxu0 0
    %249 = vmatpush1.bf16.msra.mxu0 0
    %250 = vmatprep.subr.bf16.mxu0 0
    %251 = vmatpush1.bf16.msra.mxu0 0
    %252 = vmatprep.subr.bf16.mxu0 0
    %253 = vmatpush1.bf16.msra.mxu0 0
    %254 = vmatprep.subr.bf16.mxu0 0
    %255 = vmatpush1.bf16.msra.mxu0 0
    %256 = vmatprep.subr.bf16.mxu0 0
    %257 = vmatpush1.bf16.msra.mxu0 0
    %258 = vmatprep.subr.bf16.mxu0 0
    %259 = vmatpush1.bf16.msra.mxu0 0
    %260 = vmatprep.mubr.bf16.mxu0 0
    %261 = vmatmul.mubr.bf16.gmra.mrb[0].mxu0 %v156
    %v262 = vpop.f32.mrb[0].mxu0
    %v263 = vadd.f32 %v178, %v262
    %v264 = vpop.f32.mrb[0].mxu0
    %v265 = vpop.f32.mrb[0].mxu0
    %v266 = vpop.f32.mrb[0].mxu0
    %267 = vdwg.mxu0
    %v268 = vmax.f32 %v263, 0.0
    %v269 = vpack.c.bf16 %v268, %v268
    %v270 = vld [vmem:[%s5] sm:$0xf]
    %v271 = vld [vmem:[%s5 + $0x4] sm:$0xf]
    %v272 = vld [vmem:[%s5 + $0x8] sm:$0xf]
    %v273 = vld [vmem:[%s5 + $0xc] sm:$0xf]
    %v274 = vld [vmem:[%s5 + $0x10] sm:$0xf]
    %v275 = vld [vmem:[%s5 + $0x14] sm:$0xf]
    %v276 = vld [vmem:[%s5 + $0x18] sm:$0xf]
    %v277 = vld [vmem:[%s5 + $0x1c] sm:$0xf]
    %v278 = vld [vmem:[%s5 + $0x20] sm:$0xf]
    %v279 = vld [vmem:[%s5 + $0x24] sm:$0xf]
    %v280 = vld [vmem:[%s5 + $0x28] sm:$0xf]
    %v281 = vld [vmem:[%s5 + $0x2c] sm:$0xf]
    %v282 = vld [vmem:[%s5 + $0x30] sm:$0xf]
    %v283 = vld [vmem:[%s5 + $0x34] sm:$0xf]
    %v284 = vld [vmem:[%s5 + $0x38] sm:$0xf]
    %v285 = vld [vmem:[%s5 + $0x3c] sm:$0xf]
    %v286 = vld [vmem:[#allocation2] sm:$0x1]
    %v288 = vlaneseq
    %v289 = vshrl.u32 %v288, 7
    %v290 = vsub.s32 0, %v289
    %v291 = vrot.slane %v286, %v290
    %v309 = vunpack.c.l.b16 %v270
    %v310 = vunpack.c.l.b16 %v271
    %v311 = vunpack.c.l.b16 %v272
    %v312 = vunpack.c.l.b16 %v273
    %v313 = vunpack.c.l.b16 %v274
    %v314 = vunpack.c.l.b16 %v275
    %v315 = vunpack.c.l.b16 %v276
    %v316 = vunpack.c.l.b16 %v277
    %v317 = vunpack.c.l.b16 %v278
    %v318 = vunpack.c.l.b16 %v279
    %v319 = vunpack.c.l.b16 %v280
    %v320 = vunpack.c.l.b16 %v281
    %v321 = vunpack.c.l.b16 %v282
    %v322 = vunpack.c.l.b16 %v283
    %v323 = vunpack.c.l.b16 %v284
    %v324 = vunpack.c.l.b16 %v285
    %v325 = vpack.c.b16 %v310, %v309
    %v326 = vpack.c.b16 %v312, %v311
    %v327 = vpack.c.b16 %v314, %v313
    %v328 = vpack.c.b16 %v316, %v315
    %v329 = vpack.c.b16 %v318, %v317
    %v330 = vpack.c.b16 %v320, %v319
    %v331 = vpack.c.b16 %v322, %v321
    %v332 = vpack.c.b16 %v324, %v323
    %341 = vmatprep.subr.bf16.mxu0 0
    %342 = vmatpush1.bf16.msra.mxu0 %v325
    %343 = vmatprep.subr.bf16.mxu0 0
    %344 = vmatpush1.bf16.msra.mxu0 %v326
    %345 = vmatprep.subr.bf16.mxu0 0
    %346 = vmatpush1.bf16.msra.mxu0 %v327
    %347 = vmatprep.subr.bf16.mxu0 0
    %348 = vmatpush1.bf16.msra.mxu0 %v328
    %349 = vmatprep.subr.bf16.mxu0 0
    %350 = vmatpush1.bf16.msra.mxu0 %v329
    %351 = vmatprep.subr.bf16.mxu0 0
    %352 = vmatpush1.bf16.msra.mxu0 %v330
    %353 = vmatprep.subr.bf16.mxu0 0
    %354 = vmatpush1.bf16.msra.mxu0 %v331
    %355 = vmatprep.subr.bf16.mxu0 0
    %356 = vmatpush1.bf16.msra.mxu0 %v332
    %357 = vmatprep.subr.bf16.mxu0 0
    %358 = vmatpush1.bf16.msra.mxu0 0
    %359 = vmatprep.subr.bf16.mxu0 0
    %360 = vmatpush1.bf16.msra.mxu0 0
    %361 = vmatprep.subr.bf16.mxu0 0
    %362 = vmatpush1.bf16.msra.mxu0 0
    %363 = vmatprep.subr.bf16.mxu0 0
    %364 = vmatpush1.bf16.msra.mxu0 0
    %365 = vmatprep.subr.bf16.mxu0 0
    %366 = vmatpush1.bf16.msra.mxu0 0
    %367 = vmatprep.subr.bf16.mxu0 0
    %368 = vmatpush1.bf16.msra.mxu0 0
    %369 = vmatprep.subr.bf16.mxu0 0
    %370 = vmatpush1.bf16.msra.mxu0 0
    %371 = vmatprep.subr.bf16.mxu0 0
    %372 = vmatpush1.bf16.msra.mxu0 0
    %373 = vmatprep.mubr.bf16.mxu0 0
    %374 = vmatmul.mubr.bf16.gmra.mrb[0].mxu0 %v269
    %v375 = vpop.f32.mrb[0].mxu0
    %v376 = vadd.f32 %v291, %v375
    %v377 = vpop.f32.mrb[0].mxu0
    %v378 = vpop.f32.mrb[0].mxu0
    %v379 = vpop.f32.mrb[0].mxu0
    %380 = vdwg.mxu0
    %vm381 = vcmask 7168
    %382 = vst.msk [vmem:[%s7] sm:$0xff] %vm381, %v376
    // Predicated region
    $region34: #{tpu_custom_call.1} parent=1 // pred_check
      _
    $region35: #{tpu_custom_call.1} parent=1 // pred_check_branch
      %384 = sbr.rel (0) target = $region37
    $region36: #{tpu_custom_call.1} parent=1 // pred_region
      _
    $region37: #{tpu_custom_call.1} parent=1 // pred_fallthru
      _
    // Predicated region
    $region38: #{tpu_custom_call.1} parent=1 // pred_check
      _
    $region39: #{tpu_custom_call.1} parent=1 // pred_check_branch
      %386 = sbr.rel (0) target = $region41
    $region40: #{tpu_custom_call.1} parent=1 // pred_region
      _
    $region41: #{tpu_custom_call.1} parent=1 // pred_fallthru
      _
    %387 = vsyncpa [#allocation4], 1

</llo_original>
